<compile_context>
chip_gen: v5e
topology: v5e:2x2
jax: 0.10.0
libtpu: 0.0.40
codegen_flags: <defaults>
</compile_context>

<pallas_src>
import functools

import jax
import jax.numpy as jnp
from jax.experimental import pallas as pl
from jax.experimental.pallas import tpu as pltpu


def _round_up(a: int, b: int) -> int:
    return (a + b - 1) // b * b


def rbm_forward_kernel(x_ref, w_ref, hb_ref, o_ref, *, op_dtype):
    # x arrives in its original dtype (one HBM read); cast to the MXU operand
    # dtype on the VPU here instead of a separate wrapper-side cast pass.
    x = x_ref[...].astype(op_dtype)
    act = jnp.dot(x, w_ref[...], preferred_element_type=jnp.float32)
    act = act + hb_ref[...]                       # (TM, N) + (1, N) broadcast
    # sigmoid(a) = 0.5 * tanh(0.5 * a) + 0.5  -> single EUP transcendental.
    o_ref[...] = (0.5 * jnp.tanh(0.5 * act) + 0.5).astype(o_ref.dtype)


@functools.partial(
    jax.jit,
    static_argnames=("block_m", "min_grid", "operand_dtype", "out_dtype"))
def rbm_forward(x, W, hb, *, block_m=1024, min_grid=2,
                operand_dtype=jnp.bfloat16, out_dtype=jnp.float32):
    """sigmoid(x @ W + hb), batch-tiled Pallas kernel.

    x : (B, n_visible) f32, W : (n_visible, n_hidden), hb : (n_hidden,)
    """
    B, n_visible = x.shape
    n_hidden = W.shape[1]

    # Weights: cast once (tiny), bias kept in f32 for the add.
    wq = W.astype(operand_dtype)
    hb2d = hb.reshape(1, n_hidden).astype(jnp.float32)

    # Batch tile: multiple of 8 sublanes, capped at block_m, and small enough
    # to produce >= min_grid grid steps (both v7x TensorCores busy).
    tm = min(block_m, _round_up(B, 8))
    if min_grid > 1:
        tm = min(tm, max(8, _round_up(pl.cdiv(B, min_grid), 8)))
    grid_m = pl.cdiv(B, tm)   # ragged tail handled by Pallas block masking

    # Raise the scoped VMEM limit only if resident W/hb plus double-buffered
    # x/out tiles would exceed the 32 MiB default.
    x_tile_bytes = tm * n_visible * x.dtype.itemsize
    o_tile_bytes = tm * n_hidden * jnp.dtype(out_dtype).itemsize
    w_bytes = n_visible * n_hidden * jnp.dtype(operand_dtype).itemsize
    need = w_bytes + n_hidden * 4 + 2 * (x_tile_bytes + o_tile_bytes)
    vmem_limit = int(need * 1.5) if need * 1.5 > (32 << 20) else None

    kernel = functools.partial(rbm_forward_kernel, op_dtype=operand_dtype)

    out = pl.pallas_call(
        kernel,
        out_shape=jax.ShapeDtypeStruct((B, n_hidden), out_dtype),
        grid=(grid_m,),
        in_specs=[
            # x: one batch tile per grid step (lane dim = full n_visible).
            pl.BlockSpec((tm, n_visible), lambda i: (i, 0)),
            # W, hb: constant block index -> VMEM-resident across the grid.
            pl.BlockSpec((n_visible, n_hidden), lambda i: (0, 0)),
            pl.BlockSpec((1, n_hidden), lambda i: (0, 0)),
        ],
        out_specs=pl.BlockSpec((tm, n_hidden), lambda i: (i, 0)),
        compiler_params=pltpu.CompilerParams(
            dimension_semantics=("parallel",),
            vmem_limit_bytes=vmem_limit),
    )(x, wq, hb2d)

    return out


if __name__ == "__main__":
    # Shapes from the module defaults: n_visible=49, n_hidden=128, batch=64.
    n_visible, n_hidden = 49, 128
    batch = 64

    key = jax.random.PRNGKey(0)
    kx, kw, kx2 = jax.random.split(key, 3)

    # Mirror the PyTorch __init__: W = randn * 0.01, hb = zeros (vb unused here).
    W = jax.random.normal(kw, (n_visible, n_hidden), dtype=jnp.float32) * 0.01
    hb = jnp.zeros((n_hidden,), dtype=jnp.float32)
    x = jax.random.uniform(kx, (batch, n_visible), dtype=jnp.float32)

    # Default path: bf16 MXU operands, f32 output (module-parity dtype).
    out = jax.block_until_ready(rbm_forward(x, W, hb))
    assert out.shape == (batch, n_hidden) and out.dtype == jnp.float32
    ref_f32 = jax.nn.sigmoid(x @ W + hb)
    assert jnp.allclose(out, ref_f32, atol=5e-3, rtol=5e-3), "mismatch (default)"

    # Exact-parity path: f32 operands.
    out_exact = jax.block_until_ready(
        rbm_forward(x, W, hb, operand_dtype=jnp.float32))
    assert jnp.allclose(out_exact, ref_f32, atol=1e-5, rtol=1e-5), "mismatch (f32)"

    # Ragged batch (B % tm != 0), >= 2 grid steps, bf16-output writeback path.
    x2 = jax.random.uniform(kx2, (300, n_visible), dtype=jnp.float32)
    out2 = jax.block_until_ready(rbm_forward(x2, W, hb, out_dtype=jnp.bfloat16))
    ref2 = jax.nn.sigmoid(x2 @ W + hb)
    assert out2.shape == (300, n_hidden) and out2.dtype == jnp.bfloat16
    assert jnp.allclose(out2.astype(jnp.float32), ref2, atol=1e-2, rtol=1e-2), \
        "mismatch (ragged batch, bf16 out)"

    # TODO(synk): forward() discards the torch.bernoulli sample; if the sampled
    # hidden states are ever needed, add pltpu.prng_seed + prng_random_bits.
    print("KERNEL_OK")
</pallas_src>

<mosaic_0001>
module attributes {stable_mosaic.version = 11 : i64} {
  func.func @rbm_forward_kernel(%arg0: i32, %arg1: memref<32x49xf32, #tpu.memory_space<vmem>>, %arg2: memref<49x128xbf16, #tpu.memory_space<vmem>>, %arg3: memref<1x128xf32, #tpu.memory_space<vmem>>, %arg4: memref<32x128xf32, #tpu.memory_space<vmem>>) attributes {dimension_semantics = [#tpu.dimension_semantics<parallel>], iteration_bounds = array<i64: 2>, scalar_prefetch = 0 : i64, scratch_operands = 0 : i64, tpu.core_type = #tpu.core_type<tc>, window_params = [{transform_indices = @transform_0, window_bounds = array<i64: 32, 49>}, {pipeline_mode = #tpu.pipeline_mode<synchronous>, transform_indices = @transform_1, window_bounds = array<i64: 49, 128>}, {pipeline_mode = #tpu.pipeline_mode<synchronous>, transform_indices = @transform_2, window_bounds = array<i64: 1, 128>}, {transform_indices = @transform_3, window_bounds = array<i64: 32, 128>}]} {
    %c0 = arith.constant 0 : index
    %c0_0 = arith.constant 0 : index
    %0 = vector.load %arg1[%c0, %c0_0] : memref<32x49xf32, #tpu.memory_space<vmem>>, vector<32x49xf32>
    %1 = arith.truncf %0 : vector<32x49xf32> to vector<32x49xbf16>
    %c0_1 = arith.constant 0 : index
    %c0_2 = arith.constant 0 : index
    %2 = vector.load %arg2[%c0_1, %c0_2] : memref<49x128xbf16, #tpu.memory_space<vmem>>, vector<49x128xbf16>
    %cst = arith.constant dense<0.000000e+00> : vector<32x128xf32>
    %3 = tpu.matmul %1, %2, %cst {dimension_numbers = #tpu.dot_dimension_numbers<[1], [0], [0], [1], [0, 0, 1, 1], [], []>} : vector<32x49xbf16>, vector<49x128xbf16>, vector<32x128xf32> -> vector<32x128xf32>
    %c0_3 = arith.constant 0 : index
    %c0_4 = arith.constant 0 : index
    %4 = vector.load %arg3[%c0_3, %c0_4] : memref<1x128xf32, #tpu.memory_space<vmem>>, vector<1x128xf32>
    %5 = vector.broadcast %4 : vector<1x128xf32> to vector<32x128xf32>
    %6 = arith.addf %3, %5 : vector<32x128xf32>
    %cst_5 = arith.constant 5.000000e-01 : f32
    %7 = vector.broadcast %cst_5 : f32 to vector<32x128xf32>
    %8 = arith.mulf %7, %6 : vector<32x128xf32>
    %9 = math.tanh %8 : vector<32x128xf32>
    %cst_6 = arith.constant 5.000000e-01 : f32
    %10 = vector.broadcast %cst_6 : f32 to vector<32x128xf32>
    %11 = arith.mulf %10, %9 : vector<32x128xf32>
    %cst_7 = arith.constant 5.000000e-01 : f32
    %12 = vector.broadcast %cst_7 : f32 to vector<32x128xf32>
    %13 = arith.addf %11, %12 : vector<32x128xf32>
    %c0_8 = arith.constant 0 : index
    %c0_9 = arith.constant 0 : index
    %14 = vector.load %arg4[%c0_8, %c0_9] : memref<32x128xf32, #tpu.memory_space<vmem>>, vector<32x128xf32>
    tpu.vector_store %arg4[%c0_8, %c0_9], %13 {strides = array<i32>} : memref<32x128xf32, #tpu.memory_space<vmem>>, vector<32x128xf32>,
    return
  }
  func.func @transform_0(%arg0: i32) -> (i32, i32) {
    %c0_i32 = arith.constant 0 : i32
    %c0_i32_0 = arith.constant 0 : i32
    return %arg0, %c0_i32 : i32, i32
  }
  func.func @transform_1(%arg0: i32) -> (i32, i32) {
    %c0_i32 = arith.constant 0 : i32
    %c0_i32_0 = arith.constant 0 : i32
    %c0_i32_1 = arith.constant 0 : i32
    return %c0_i32, %c0_i32_0 : i32, i32
  }
  func.func @transform_2(%arg0: i32) -> (i32, i32) {
    %c0_i32 = arith.constant 0 : i32
    %c0_i32_0 = arith.constant 0 : i32
    %c0_i32_1 = arith.constant 0 : i32
    return %c0_i32, %c0_i32_0 : i32, i32
  }
  func.func @transform_3(%arg0: i32) -> (i32, i32) {
    %c0_i32 = arith.constant 0 : i32
    %c0_i32_0 = arith.constant 0 : i32
    return %arg0, %c0_i32 : i32, i32
  }
}

</mosaic_0001>

<llo_original>
// kernel: rbm_forward.1
$region0: #{rbm_forward.1}
  #allocation0 [shape = 'u32[]', space=smem, size = 0x4, offset = 0x4, fixed_abs, tag = 'smem constant byte address 0x4 - core index']
  #allocation1 [shape = 'u32[72,128]{1,0:T(1,128)}', space=vmem, size = 0x9000, scoped, tag = 'internal scratch']
  %s0 = inlined_call_operand.vmem [shape: f32[64,49], index: 0, kind: input, shape index: {}]
  %s1 = inlined_call_operand.vmem [shape: bf16[49,128], index: 1, kind: input, shape index: {}]
  %s2 = inlined_call_operand.vmem [shape: f32[1,128], index: 2, kind: input, shape index: {}]
  %s3 = inlined_call_operand.hbm [shape: f32[64,128], index: 3, kind: output, shape index: {}]
  %s4 = sld [smem:[#allocation0]]
  $region45: #{rbm_forward.1} parent=0
    _
  %s6 = ssub.s32 1, %s4
  %s7 = scalar_select 0, %s6, %s4
  $region1: #{rbm_forward.1} parent=0
    #allocation2 [shape = 'u8[32768]{0}', space=vmem, size = 0x8000, scoped, tag = 'output window, operand 0']
    #allocation3 [shape = 's32[2]{0}', space=sflag, size = 0x8, scoped, tag = 'scoped memory for rbm_forward.1']
    %8 = vsyncpa [#allocation3], 0
    %s9 = scalar_lea.sflag [#allocation3], 1
    %10 = vsyncpa %s9, 0
    loop: start=0, step=1, limit=4
    $region2: #{rbm_forward.1} parent=1 // loop_pre_header
      _
    $region3: #{rbm_forward.1} parent=1 // loop_header
      %s12 = sphi 0, %s16
      %p13 = scmp.ge.s32.totalorder %s12, 4
      %s22 = sphi 0, %s24
      %s25 = sphi 0, %s22
      %s26 = sphi 0, %s25
      %s42 = sphi 0, %s26
      %s46 = sphi 0, %s46
      %s48 = sphi 0, %s46
      %s49 = sphi 0, %s48
      %s63 = sphi 0, %s49
      %s67 = sphi 0, %s67
      %s69 = sphi 0, %s67
      %s70 = sphi 0, %s69
      %s84 = sphi 0, %s70
      %s90 = sphi 0, %s92
      %s93 = sphi 0, %s90
      %s94 = sphi 0, %s93
      %s110 = sphi 0, %s94
    $region4: #{rbm_forward.1} parent=1 // loop_header_branch
      %15 = sbr.rel (%p13) target = $region8
    $region5: #{rbm_forward.1} parent=1 // loop_body
      %s17 = ssub.s32 %s12, 1
      %s18 = ssub.s32 %s12, 2
      %s19 = sadd.s32 %s12, 1
      %s20 = ssub.s32 %s12, %s19
      %p21 = scmp.eq.s32.totalorder %s20, 0
      %s23 = sadd.s32 %s22, 1
      %s24 = scalar_select %p21, %s22, %s23
      %p27 = pneg %p21
      %p28 = scmp.eq.s32.totalorder %s12, 1
      %p29 = por %p27, %p28
      %p30 = scmp.ne.s32.totalorder %s22, %s25
      %p31 = scmp.eq.s32.totalorder %s12, 0
      %p32 = por %p30, %p31
      %p33 = scmp.ne.s32.totalorder %s22, %s25
      %p34 = scmp.eq.s32.totalorder %s17, 1
      %p35 = por %p33, %p34
      %p36 = scmp.ne.s32.totalorder %s25, %s26
      %p37 = scmp.eq.s32.totalorder %s17, 0
      %p38 = por %p36, %p37
      %p39 = scmp.ne.s32.totalorder %s25, %s26
      %p40 = scmp.eq.s32.totalorder %s18, 1
      %p41 = por %p39, %p40
      %p43 = scmp.ne.s32.totalorder %s26, %s42
      %p44 = scmp.eq.s32.totalorder %s18, 0
      %p45 = por %p43, %p44
      %s47 = sadd.s32 %s46, 1
      %p50 = scmp.eq.s32.totalorder %s12, 1
      %p51 = scmp.ne.s32.totalorder %s46, %s48
      %p52 = scmp.eq.s32.totalorder %s12, 0
      %p53 = por %p51, %p52
      %p54 = scmp.ne.s32.totalorder %s46, %s48
      %p55 = scmp.eq.s32.totalorder %s17, 1
      %p56 = por %p54, %p55
      %p57 = scmp.ne.s32.totalorder %s48, %s49
      %p58 = scmp.eq.s32.totalorder %s17, 0
      %p59 = por %p57, %p58
      %p60 = scmp.ne.s32.totalorder %s48, %s49
      %p61 = scmp.eq.s32.totalorder %s18, 1
      %p62 = por %p60, %p61
      %p64 = scmp.ne.s32.totalorder %s49, %s63
      %p65 = scmp.eq.s32.totalorder %s18, 0
      %p66 = por %p64, %p65
      %s68 = sadd.s32 %s67, 1
      %p71 = scmp.eq.s32.totalorder %s12, 1
      %p72 = scmp.ne.s32.totalorder %s67, %s69
      %p73 = scmp.eq.s32.totalorder %s12, 0
      %p74 = por %p72, %p73
      %p75 = scmp.ne.s32.totalorder %s67, %s69
      %p76 = scmp.eq.s32.totalorder %s17, 1
      %p77 = por %p75, %p76
      %p78 = scmp.ne.s32.totalorder %s69, %s70
      %p79 = scmp.eq.s32.totalorder %s17, 0
      %p80 = por %p78, %p79
      %p81 = scmp.ne.s32.totalorder %s69, %s70
      %p82 = scmp.eq.s32.totalorder %s18, 1
      %p83 = por %p81, %p82
      %p85 = scmp.ne.s32.totalorder %s70, %s84
      %p86 = scmp.eq.s32.totalorder %s18, 0
      %p87 = por %p85, %p86
      %s88 = ssub.s32 %s12, %s19
      %p89 = scmp.eq.s32.totalorder %s88, 0
      %s91 = sadd.s32 %s90, 1
      %s92 = scalar_select %p89, %s90, %s91
      %p95 = pneg %p89
      %p96 = scmp.eq.s32.totalorder %s12, 1
      %p97 = por %p95, %p96
      %p98 = scmp.ne.s32.totalorder %s90, %s93
      %p99 = scmp.eq.s32.totalorder %s12, 0
      %p100 = por %p98, %p99
      %p101 = scmp.ne.s32.totalorder %s90, %s93
      %p102 = scmp.eq.s32.totalorder %s17, 1
      %p103 = por %p101, %p102
      %p104 = scmp.ne.s32.totalorder %s93, %s94
      %p105 = scmp.eq.s32.totalorder %s17, 0
      %p106 = por %p104, %p105
      %p107 = scmp.ne.s32.totalorder %s93, %s94
      %p108 = scmp.eq.s32.totalorder %s18, 1
      %p109 = por %p107, %p108
      %p111 = scmp.ne.s32.totalorder %s94, %s110
      %p112 = scmp.eq.s32.totalorder %s18, 0
      %p113 = por %p111, %p112
      %p114 = scmp.le.s32.totalorder 1, %s12
      %p115 = scmp.lt.s32.totalorder %s12, 3
      %p116 = pnand %p114, %p115
      %p117 = pneg %p116
      // Predicated region
      $region9: #{rbm_forward.1} parent=5 // pred_check
        _
      $region10: #{rbm_forward.1} parent=5 // pred_check_branch
        %119 = sbr.rel (%p116) target = $region12
      $region11: #{rbm_forward.1} parent=5 // pred_region
        %s120 = ssub.s32 %s12, 1
        // Predicated region
        $region13: #{rbm_forward.1} parent=11 // pred_check
          %p121 = pneg %p59
        $region14: #{rbm_forward.1} parent=11 // pred_check_branch
          %123 = sbr.rel (%p121) target = $region16
        $region15: #{rbm_forward.1} parent=11 // pred_region
          _
        $region16: #{rbm_forward.1} parent=11 // pred_fallthru
          _
        // Predicated region
        $region17: #{rbm_forward.1} parent=11 // pred_check
          %p124 = pneg %p80
        $region18: #{rbm_forward.1} parent=11 // pred_check_branch
          %126 = sbr.rel (%p124) target = $region20
        $region19: #{rbm_forward.1} parent=11 // pred_region
          _
        $region20: #{rbm_forward.1} parent=11 // pred_fallthru
          _
      $region12: #{rbm_forward.1} parent=5 // pred_fallthru
        _
      %p127 = scmp.lt.s32.totalorder %s12, 2
      // Predicated region
      $region21: #{rbm_forward.1} parent=5 // pred_check
        %p128 = pneg %p127
      $region22: #{rbm_forward.1} parent=5 // pred_check_branch
        %130 = sbr.rel (%p128) target = $region24
      $region23: #{rbm_forward.1} parent=5 // pred_region
        // Predicated region
        $region25: #{rbm_forward.1} parent=23 // pred_check
          %p131 = pneg %p32
        $region26: #{rbm_forward.1} parent=23 // pred_check_branch
          %133 = sbr.rel (%p131) target = $region28
        $region27: #{rbm_forward.1} parent=23 // pred_region
          %s134 = smul.u32 4, %s12
          %p135 = scmp.lt.s32.totalorder %s134, 7
          %s136 = scalar_select %p135, %s134, 7
          %s137 = smul.addr %s136, 8
          %s138 = scalar_lea.vmem %s0, %s137
          %s139 = smul.u32 4, %s12
        $region28: #{rbm_forward.1} parent=23 // pred_fallthru
          _
      $region24: #{rbm_forward.1} parent=5 // pred_fallthru
        _
      %p140 = scmp.le.s32.totalorder 1, %s12
      %p141 = scmp.lt.s32.totalorder %s12, 3
      %p142 = pnand %p140, %p141
      %p143 = pneg %p142
      // Predicated region
      $region29: #{rbm_forward.1} parent=5 // pred_check
        _
      $region30: #{rbm_forward.1} parent=5 // pred_check_branch
        %145 = sbr.rel (%p142) target = $region32
      $region31: #{rbm_forward.1} parent=5 // pred_region
        %s146 = ssub.s32 %s12, 1
        %s147 = smul.u32 4, %s17
        %p148 = scmp.lt.s32.totalorder %s147, 7
        %s149 = scalar_select %p148, %s147, 7
        %s150 = smul.addr %s149, 8
        %s151 = scalar_lea.vmem %s0, %s150
        %p152 = pneg %p38
        %p153 = pneg %p35
        %p154 = pneg %p59
        %p155 = pneg %p56
        %p156 = pneg %p80
        %p157 = pneg %p77
        %p158 = pneg %p106
        %p159 = pneg %p103
        %s160 = sand.u32 %s93, 1
        %s161 = scalar_lea.sflag [#allocation3], %s160
        %s162 = sand.u32 %s93, 1
        %s163 = smul.addr %s162, 32
        %s164 = scalar_lea.vmem [#allocation2], %s163
        %s165 = smul.u32 4, %s17
        %p166 = scmp.lt.s32.totalorder %s165, 7
        %s167 = scalar_select %p166, %s165, 7
        %s168 = smul.addr %s167, 8
        %s169 = scalar_lea.vmem %s0, %s168
        %s170 = smul.u32 4, %s17
        %s171 = smul.u32 4, %s17
        %v173 = vld [vmem:[%s169] sm:$0xff]
        %v174 = vld [vmem:[%s169 + $0x8] sm:$0xff]
        %v175 = vld [vmem:[%s169 + $0x10] sm:$0xff]
        %v176 = vld [vmem:[%s169 + $0x18] sm:$0xff]
        %v177 = vpack.c.bf16 %v174, %v173
        %v178 = vpack.c.bf16 %v176, %v175
        %v179 = vld [vmem:[%s1] sm:$0xf]
        %v180 = vld [vmem:[%s1 + $0x4] sm:$0xf]
        %v181 = vld [vmem:[%s1 + $0x8] sm:$0xf]
        %v182 = vld [vmem:[%s1 + $0xc] sm:$0xf]
        %v183 = vld [vmem:[%s1 + $0x10] sm:$0xf]
        %v184 = vld [vmem:[%s1 + $0x14] sm:$0xf]
        %v185 = vld [vmem:[%s1 + $0x18] sm:$0x1]
        %v186 = vld [vmem:[%s2] sm:$0x1]
        %v188 = vperm.slane %v186, 0
        %v197 = vunpack.c.l.b16 %v179
        %v198 = vunpack.c.l.b16 %v180
        %v199 = vunpack.c.l.b16 %v181
        %v200 = vunpack.c.l.b16 %v182
        %v201 = vunpack.c.l.b16 %v183
        %v202 = vunpack.c.l.b16 %v184
        %v203 = vunpack.c.l.b16 %v185
        %v204 = vpack.c.b16 %v198, %v197
        %v205 = vpack.c.b16 %v200, %v199
        %v206 = vpack.c.b16 %v202, %v201
        %v207 = vpack.c.b16 %v203, %v203
        %vm211 = vcmask 400384
        %v213 = vsel %vm211, %v177, 0
        %v216 = vsel %vm211, %v178, 0
        %vm218 = vcmask 1040384
        %v219 = vsel 0, 4294967295, 65535
        %v220 = vsel %vm218, %v219, 0
        %v222 = vand.u32 %v207, %v220
        %224 = vmatpush.bf16.msra.mxu0 0
        %225 = vmatpush.bf16.msra.mxu0 0
        %226 = vmatpush.bf16.msra.mxu0 0
        %227 = vmatpush.bf16.msra.mxu0 0
        %228 = vmatpush.bf16.msra.mxu0 %v222
        %229 = vmatpush.bf16.msra.mxu0 %v206
        %230 = vmatpush.bf16.msra.mxu0 %v205
        %231 = vmatpush.bf16.msra.mxu0 %v204
        %232 = vmatmul.bf16.gmra.mxu0 %v213
        %v233 = vpop.f32.mrf.mxu0
        %v234 = vadd.f32 %v188, %v233
        %v235 = vpop.f32.mrf.mxu0
        %v236 = vadd.f32 %v188, %v235
        %237 = vmatmul.bf16.gmra.mxu0 %v216
        %v238 = vpop.f32.mrf.mxu0
        %v239 = vadd.f32 %v188, %v238
        %v240 = vpop.f32.mrf.mxu0
        %v241 = vadd.f32 %v188, %v240
        %242 = vdwg.mxu0
        %v243 = vmul.f32 %v234, 0.5
        %v244 = vmul.f32 %v236, 0.5
        %v245 = vmul.f32 %v239, 0.5
        %v246 = vmul.f32 %v241, 0.5
        %v247 = vtanh.pop %v243
        %v248 = vtanh.pop %v244
        %v249 = vtanh.pop %v245
        %v250 = vtanh.pop %v246
        %v251 = vmul.f32 %v247, 0.5
        %v252 = vmul.f32 %v248, 0.5
        %v253 = vmul.f32 %v249, 0.5
        %v254 = vmul.f32 %v250, 0.5
        %v255 = vadd.f32 %v251, 0.5
        %v256 = vadd.f32 %v252, 0.5
        %v257 = vadd.f32 %v253, 0.5
        %v258 = vadd.f32 %v254, 0.5
        %259 = vst [vmem:[%s164] sm:$0xff] %v255
        %260 = vst [vmem:[%s164 + $0x8] sm:$0xff] %v256
        %261 = vst [vmem:[%s164 + $0x10] sm:$0xff] %v257
        %262 = vst [vmem:[%s164 + $0x18] sm:$0xff] %v258
        %s263 = sand.u32 %s93, 1
        %s264 = scalar_lea.sflag [#allocation3], %s263
        %s265 = sand.u32 %s93, 1
        %s266 = smul.addr %s265, 32
        %s267 = scalar_lea.vmem [#allocation2], %s266
        // Predicated region
        $region33: #{rbm_forward.1} parent=31 // pred_check
          %p268 = pneg %p103
        $region34: #{rbm_forward.1} parent=31 // pred_check_branch
          %270 = sbr.rel (%p268) target = $region36
        $region35: #{rbm_forward.1} parent=31 // pred_region
          %s271 = smul.u32 4, %s17
          %273 = vsyncadd %s264, 0
          %s274 = smul.addr %s271, 8
          %s275 = scalar_lea.hbm %s3, %s274
          %s276 = sshll.u32 %s267, 4
          %s277 = int_to_ptr.vmem [resolvable:$true] %s276
          %s278 = sshll.u32 %s275, 4
          %s279 = int_to_ptr.hbm [resolvable:$true] %s278
          %284 = dma.vmem_to_hbm [thread:$0]  %s277, 512, %s279, %s264, 128, 128, 8
        $region36: #{rbm_forward.1} parent=31 // pred_fallthru
          _
      $region32: #{rbm_forward.1} parent=5 // pred_fallthru
        _
      %p285 = scmp.le.s32.totalorder 2, %s12
      // Predicated region
      $region37: #{rbm_forward.1} parent=5 // pred_check
        %p286 = pneg %p285
      $region38: #{rbm_forward.1} parent=5 // pred_check_branch
        %288 = sbr.rel (%p286) target = $region40
      $region39: #{rbm_forward.1} parent=5 // pred_region
        %s289 = ssub.s32 %s12, 2
        // Predicated region
        $region41: #{rbm_forward.1} parent=39 // pred_check
          %p290 = pneg %p109
        $region42: #{rbm_forward.1} parent=39 // pred_check_branch
          %292 = sbr.rel (%p290) target = $region44
        $region43: #{rbm_forward.1} parent=39 // pred_region
          %s293 = sand.u32 %s94, 1
          %s294 = scalar_lea.sflag [#allocation3], %s293
          %s295 = sand.u32 %s94, 1
          %s296 = smul.addr %s295, 32
          %s297 = scalar_lea.vmem [#allocation2], %s296
          %299 = dma.done %s294, 512
        $region44: #{rbm_forward.1} parent=39 // pred_fallthru
          _
      $region40: #{rbm_forward.1} parent=5 // pred_fallthru
        _
    $region6: #{rbm_forward.1} parent=1 // loop_footer
      %s16 = sadd.s32 1, %s12
    $region7: #{rbm_forward.1} parent=1 // loop_footer_branch
      %11 = sbr.rel target = $region3
    $region8: #{rbm_forward.1} parent=1 // loop_exit
      _
    %300 = vsyncpa [#allocation3], 1
    %s301 = scalar_lea.sflag [#allocation3], 1
    %302 = vsyncpa %s301, 1

</llo_original>
